<compile_context>
chip_gen: v7x
topology: tpu7x:2x2x1
jax: 0.10.0
libtpu: 0.0.40
codegen_flags: <defaults>
</compile_context>

<pallas_src>
import functools
import math

import numpy as np
import jax
import jax.numpy as jnp
from jax.experimental import pallas as pl
from jax.experimental.pallas import tpu as pltpu

NUM_REL = 6  # children, lefts, rights, conjuncts, head, ancestors


def _nsteps(max_dist):
    """Squarings s so that (A + I)^(2^s) covers all paths of length <= max_dist."""
    m = max(int(max_dist), 1)
    return int(math.ceil(math.log2(m))) if m > 1 else 0


def _pick_row_tile(L, row_tile):
    if row_tile is not None and L % row_tile == 0 and (row_tile == L or row_tile % 8 == 0):
        return int(row_tile)
    if L <= 128:
        return L
    for step in (16, 8):                 # prefer 16-aligned tiles (packed bf16 scratch slicing)
        tl = 128
        while tl >= step:
            if tl % step == 0 and L % tl == 0:
                return tl
            tl -= step
    return L                             # no 8-aligned divisor <= 128 (rare, large odd L)


def _vmem_limit_bytes(L, tl, out_bytes, scratch_bytes):
    scratch = 2 * L * L * scratch_bytes                        # anc + conj closure scratch
    out_db = 2 * NUM_REL * tl * L * out_bytes                  # double-buffered output block
    in_db = 2 * 2 * (8 * max(L, 128) + max(L, 8) * 128) * 4    # padded (1,L)+(L,1) int32 blocks
    closure_tmp = 6 * L * L * 2                                # bf16/bool temporaries at r == 0
    need = scratch + out_db + in_db + closure_tmp + (4 << 20)
    try:
        cap = int(pltpu.get_tpu_info().vmem_capacity_bytes)
    except Exception:
        cap = 64 << 20                                         # v7x per-core VMEM (smallest gen)
    return int(min(max(need, 16 << 20), int(cap * 0.9)))


def _pair_dep_rel_kernel(heads_row_ref, heads_col_ref, conj_row_ref, conj_col_ref,
                         out_ref, anc_sc, conj_sc, *, tl, n_anc_steps, n_conj_steps):
    # heads_row_ref / conj_row_ref : (1, L) int32  (values along lanes)
    # heads_col_ref / conj_col_ref : (L, 1) int32  (values along sublanes)
    # out_ref                      : (6, tl, L)    planes for the current row tile
    # anc_sc / conj_sc             : (L, L)        closure scratch, persistent across r
    L = heads_row_ref.shape[-1]
    r = pl.program_id(1)

    # NOTE: the closures carry state across the row-tile ("arbitrary") axis and are
    # rebuilt at r == 0 of every batch element.  This relies on r being the fastest grid
    # axis within each b, which holds for Pallas/Mosaic row-major traversal and for
    # contiguous megacore sharding of the "parallel" b axis.
    @pl.when(r == 0)
    def _build_closures():
        h_row = heads_row_ref[...]                              # (1, L) head[q] along lanes
        h_col = heads_col_ref[...]                              # (L, 1) head[p] along sublanes
        c_row = conj_row_ref[...]
        c_col = conj_col_ref[...]
        ii = jax.lax.broadcasted_iota(jnp.int32, (L, 1), 0)     # p (sublane index)
        jj = jax.lax.broadcasted_iota(jnp.int32, (1, L), 1)     # q (lane index)
        diag = ii == jj                                         # (L, L) bool

        # Ancestors: parent adjacency A[p, q] = (head[p] == q, p not root); padding
        # (head == -1) contributes nothing.  Closure by repeated squaring of (A + I):
        # bf16 operands (exact {0,1}), f32 accumulation, re-binarize each step.
        a = jnp.logical_and(h_col == jj, h_col != ii)
        m = jnp.logical_or(a, diag).astype(jnp.bfloat16)
        for _ in range(n_anc_steps):
            m = (jnp.dot(m, m, preferred_element_type=jnp.float32) > 0.5
                 ).astype(jnp.bfloat16)
        anc_sc[...] = jnp.logical_and(m > 0.5, jnp.logical_not(diag)).astype(anc_sc.dtype)

        # Conjuncts: symmetric 'conj'-arc adjacency; connected components via the same
        # squaring trick, self excluded.
        e_dn = jnp.logical_and(c_col > 0, h_col == jj)          # p --conj--> head[p] = q
        e_up = jnp.logical_and(c_row > 0, h_row == ii)          # q --conj--> head[q] = p
        mc = jnp.logical_or(jnp.logical_or(e_dn, e_up), diag).astype(jnp.bfloat16)
        for _ in range(n_conj_steps):
            mc = (jnp.dot(mc, mc, preferred_element_type=jnp.float32) > 0.5
                  ).astype(jnp.bfloat16)
        conj_sc[...] = jnp.logical_and(mc > 0.5, jnp.logical_not(diag)).astype(conj_sc.dtype)

    rs = pl.multiple_of(r * tl, tl)
    row_ids = jax.lax.broadcasted_iota(jnp.int32, (tl, L), 0) + rs   # j (absolute row)
    col_ids = jax.lax.broadcasted_iota(jnp.int32, (tl, L), 1)        # k (column token)

    h_lane = heads_row_ref[...]                     # (1, L) : head[k]
    h_rows = heads_col_ref[pl.ds(rs, tl), :]        # (tl, 1): head[j] for the tile rows

    dt = out_ref.dtype
    child = jnp.logical_and(h_lane == row_ids, col_ids != row_ids)
    out_ref[0, :, :] = child.astype(dt)                                        # children
    out_ref[1, :, :] = jnp.logical_and(child, col_ids < row_ids).astype(dt)    # lefts
    out_ref[2, :, :] = jnp.logical_and(child, col_ids > row_ids).astype(dt)    # rights
    out_ref[3, :, :] = conj_sc[pl.ds(rs, tl), :].astype(dt)                    # conjuncts
    out_ref[4, :, :] = (h_rows == col_ids).astype(dt)                          # head
    out_ref[5, :, :] = anc_sc[pl.ds(rs, tl), :].astype(dt)                     # ancestors


def pair_token_dependency_relation_planes(heads, conj, *, row_tile=None,
                                          out_dtype=jnp.bfloat16,
                                          max_head_depth=None,
                                          max_conj_distance=None):
    """Performant layout: the 6 relation planes as (B, 6, L, L), lane-dense.

    Values are exactly 0/1, so bfloat16 output is lossless.  max_head_depth /
    max_conj_distance are optional *upper bounds* (max head-chain length / max conj
    component graph distance) that reduce the number of closure squarings; defaults
    (L - 1) are always safe.
    """
    heads = jnp.asarray(heads, jnp.int32)
    conj = jnp.asarray(conj, jnp.int32)
    B, L = heads.shape

    tl = _pick_row_tile(L, row_tile)
    n_anc_steps = min(_nsteps(L - 1 if max_head_depth is None else max_head_depth),
                      _nsteps(L - 1))
    n_conj_steps = min(_nsteps(L - 1 if max_conj_distance is None else max_conj_distance),
                       _nsteps(L - 1))

    # bf16 closure scratch (halves VMEM, matters on v7x) whenever the dynamic sublane
    # slice offsets (multiples of tl) stay aligned to the packed bf16 row pair.
    scratch_dtype = jnp.bfloat16 if (tl == L or tl % 16 == 0) else jnp.float32
    out_bytes = jnp.dtype(out_dtype).itemsize
    vmem_limit = _vmem_limit_bytes(L, tl, out_bytes, jnp.dtype(scratch_dtype).itemsize)

    kernel = functools.partial(_pair_dep_rel_kernel, tl=tl,
                               n_anc_steps=n_anc_steps, n_conj_steps=n_conj_steps)
    return pl.pallas_call(
        kernel,
        out_shape=jax.ShapeDtypeStruct((B, NUM_REL, L, L), out_dtype),
        grid=(B, L // tl),
        in_specs=[
            pl.BlockSpec((None, 1, L), lambda b, r: (b, 0, 0)),   # heads, lane-oriented
            pl.BlockSpec((None, L, 1), lambda b, r: (b, 0, 0)),   # heads, sublane-oriented
            pl.BlockSpec((None, 1, L), lambda b, r: (b, 0, 0)),   # conj,  lane-oriented
            pl.BlockSpec((None, L, 1), lambda b, r: (b, 0, 0)),   # conj,  sublane-oriented
        ],
        out_specs=pl.BlockSpec((None, NUM_REL, tl, L), lambda b, r: (b, 0, r, 0)),
        scratch_shapes=[pltpu.VMEM((L, L), scratch_dtype),
                        pltpu.VMEM((L, L), scratch_dtype)],
        compiler_params=pltpu.CompilerParams(
            dimension_semantics=("parallel", "arbitrary"),
            vmem_limit_bytes=vmem_limit),
    )(heads[:, None, :], heads[:, :, None], conj[:, None, :], conj[:, :, None])


def pair_token_dependency_relation(heads, conj, **kwargs):
    """Module-parity layout (B, L, L, 6).

    NOTE: the transpose re-streams all B*6*L^2 elements through HBM; downstream
    consumers should prefer pair_token_dependency_relation_planes() directly.
    """
    planes = pair_token_dependency_relation_planes(heads, conj, **kwargs)
    return jnp.transpose(planes, (0, 2, 3, 1))


def _reference(heads, conj, lengths, L):
    # Pure-numpy transcription of the PyTorch forward for a parse given by (heads, conj).
    B = len(lengths)
    dep = np.zeros((B, L, L, NUM_REL), np.float32)
    for b, n in enumerate(lengths):
        h = heads[b]
        adj = np.zeros((n, n), bool)                      # undirected 'conj' arcs
        for j in range(n):
            if conj[b, j]:
                k = int(h[j])
                if k != j:
                    adj[j, k] = adj[k, j] = True
        for j in range(n):
            for k in range(n):
                if k != j and int(h[k]) == j:
                    dep[b, j, k, 0] = 1                   # children
                    dep[b, j, k, 1 if k < j else 2] = 1   # lefts / rights
            dep[b, j, int(h[j]), 4] = 1                   # head
            cur = j
            while int(h[cur]) != cur:                     # ancestors
                cur = int(h[cur])
                dep[b, j, cur, 5] = 1
            vis, stack = {j}, [j]                         # conjuncts (component)
            while stack:
                u = stack.pop()
                for v in range(n):
                    if adj[u, v] and v not in vis:
                        vis.add(v)
                        stack.append(v)
            for v in vis:
                if v != j:
                    dep[b, j, v, 3] = 1
    return dep


def _max_head_chain_depth(heads_np, lengths):
    depth = 0
    for b, n in enumerate(lengths):
        for j in range(n):
            cur, steps = j, 0
            while int(heads_np[b, cur]) != cur:
                cur = int(heads_np[b, cur])
                steps += 1
            depth = max(depth, steps)
    return depth


if __name__ == "__main__":
    # TODO(synk): the spacy Doc/Token traversal (children/lefts/rights/conjuncts/head/
    # ancestors, and the dep-label check behind 'conjuncts') runs on the host; here we
    # synthesize the per-token head indices and conj-arc flags that traversal would yield.
    B = 2
    lengths = [16, 11]
    L = max(lengths)

    key = jax.random.PRNGKey(0)
    heads_np = np.full((B, L), -1, dtype=np.int32)
    conj_np = np.zeros((B, L), dtype=np.int32)
    for b, n in enumerate(lengths):
        heads_np[b, 0] = 0                                # root points to itself
        for j in range(1, n):
            key, k1, k2 = jax.random.split(key, 3)
            heads_np[b, j] = int(jax.random.randint(k1, (), 0, j))   # valid tree
            conj_np[b, j] = int(jax.random.bernoulli(k2, 0.35))

    heads = jnp.asarray(heads_np)
    conj = jnp.asarray(conj_np)

    depth = _max_head_chain_depth(heads_np, lengths)      # bounds the closure trip count

    planes = pair_token_dependency_relation_planes(heads, conj, max_head_depth=depth)
    planes = jax.block_until_ready(planes)

    ref = _reference(heads_np, conj_np, lengths, L)
    ref_planes = np.transpose(ref, (0, 3, 1, 2))          # host-side layout change only
    got = np.asarray(jax.device_get(planes)).astype(np.float32)
    assert planes.shape == (B, NUM_REL, L, L), planes.shape
    assert np.array_equal(got, ref_planes)
    print("KERNEL_OK")
</pallas_src>

<mosaic_0001>
module attributes {stable_mosaic.version = 11 : i64} {
  func.func @_pair_dep_rel_kernel(%arg0: i32, %arg1: i32, %arg2: memref<1x1x16xi32, #tpu.memory_space<vmem>>, %arg3: memref<1x16x1xi32, #tpu.memory_space<vmem>>, %arg4: memref<1x1x16xi32, #tpu.memory_space<vmem>>, %arg5: memref<1x16x1xi32, #tpu.memory_space<vmem>>, %arg6: memref<1x6x16x16xbf16, #tpu.memory_space<vmem>>, %arg7: memref<16x16xbf16, #tpu.memory_space<vmem>>, %arg8: memref<16x16xbf16, #tpu.memory_space<vmem>>) attributes {dimension_semantics = [#tpu.dimension_semantics<parallel>, #tpu.dimension_semantics<arbitrary>], iteration_bounds = array<i64: 2, 1>, scalar_prefetch = 0 : i64, scratch_operands = 2 : i64, tpu.core_type = #tpu.core_type<tc>, window_params = [{transform_indices = @transform_0, window_bounds = array<i64: 1, 1, 16>}, {transform_indices = @transform_1, window_bounds = array<i64: 1, 16, 1>}, {transform_indices = @transform_2, window_bounds = array<i64: 1, 1, 16>}, {transform_indices = @transform_3, window_bounds = array<i64: 1, 16, 1>}, {transform_indices = @transform_4, window_bounds = array<i64: 1, 6, 16, 16>}]} {
    %c0_i32 = arith.constant 0 : i32
    %0 = arith.cmpi eq, %arg1, %c0_i32 : i32
    %1 = arith.extui %0 : i1 to i32
    %c0_i32_0 = arith.constant 0 : i32
    %2 = arith.cmpi ne, %1, %c0_i32_0 : i32
    scf.if %2 {
      %c0_26 = arith.constant 0 : index
      %c0_27 = arith.constant 0 : index
      %c0_28 = arith.constant 0 : index
      %58 = vector.load %arg2[%c0_26, %c0_27, %c0_28] : memref<1x1x16xi32, #tpu.memory_space<vmem>>, vector<1x1x16xi32>
      %59 = vector.shape_cast %58 : vector<1x1x16xi32> to vector<1x16xi32>
      %c0_29 = arith.constant 0 : index
      %c0_30 = arith.constant 0 : index
      %c0_31 = arith.constant 0 : index
      %60 = vector.load %arg3[%c0_29, %c0_30, %c0_31] : memref<1x16x1xi32, #tpu.memory_space<vmem>>, vector<1x16x1xi32>
      %61 = vector.shape_cast %60 : vector<1x16x1xi32> to vector<16x1xi32>
      %c0_32 = arith.constant 0 : index
      %c0_33 = arith.constant 0 : index
      %c0_34 = arith.constant 0 : index
      %62 = vector.load %arg4[%c0_32, %c0_33, %c0_34] : memref<1x1x16xi32, #tpu.memory_space<vmem>>, vector<1x1x16xi32>
      %63 = vector.shape_cast %62 : vector<1x1x16xi32> to vector<1x16xi32>
      %c0_35 = arith.constant 0 : index
      %c0_36 = arith.constant 0 : index
      %c0_37 = arith.constant 0 : index
      %64 = vector.load %arg5[%c0_35, %c0_36, %c0_37] : memref<1x16x1xi32, #tpu.memory_space<vmem>>, vector<1x16x1xi32>
      %65 = vector.shape_cast %64 : vector<1x16x1xi32> to vector<16x1xi32>
      %66 = tpu.iota {dimensions = array<i32: 0>} : vector<16x1xi32>
      %67 = tpu.iota {dimensions = array<i32: 1>} : vector<1x16xi32>
      %68 = vector.broadcast %66 : vector<16x1xi32> to vector<16x16xi32>
      %69 = vector.broadcast %67 : vector<1x16xi32> to vector<16x16xi32>
      %70 = arith.cmpi eq, %68, %69 : vector<16x16xi32>
      %71 = vector.broadcast %61 : vector<16x1xi32> to vector<16x16xi32>
      %72 = vector.broadcast %67 : vector<1x16xi32> to vector<16x16xi32>
      %73 = arith.cmpi eq, %71, %72 : vector<16x16xi32>
      %74 = arith.cmpi ne, %61, %66 : vector<16x1xi32>
      %75 = vector.broadcast %74 : vector<16x1xi1> to vector<16x16xi1>
      %76 = arith.andi %73, %75 : vector<16x16xi1>
      %77 = arith.ori %76, %70 : vector<16x16xi1>
      %78 = arith.extui %77 : vector<16x16xi1> to vector<16x16xi32>
      %79 = arith.sitofp %78 : vector<16x16xi32> to vector<16x16xf32>
      %80 = arith.truncf %79 : vector<16x16xf32> to vector<16x16xbf16>
      %cst = arith.constant dense<0.000000e+00> : vector<16x16xf32>
      %81 = tpu.matmul %80, %80, %cst {dimension_numbers = #tpu.dot_dimension_numbers<[1], [0], [0], [1], [0, 0, 1, 1], [], []>} : vector<16x16xbf16>, vector<16x16xbf16>, vector<16x16xf32> -> vector<16x16xf32>
      %cst_38 = arith.constant 5.000000e-01 : f32
      %82 = vector.broadcast %cst_38 : f32 to vector<16x16xf32>
      %83 = arith.cmpf ogt, %81, %82 : vector<16x16xf32>
      %84 = arith.extui %83 : vector<16x16xi1> to vector<16x16xi32>
      %85 = arith.sitofp %84 : vector<16x16xi32> to vector<16x16xf32>
      %86 = arith.truncf %85 : vector<16x16xf32> to vector<16x16xbf16>
      %cst_39 = arith.constant dense<0.000000e+00> : vector<16x16xf32>
      %87 = tpu.matmul %86, %86, %cst_39 {dimension_numbers = #tpu.dot_dimension_numbers<[1], [0], [0], [1], [0, 0, 1, 1], [], []>} : vector<16x16xbf16>, vector<16x16xbf16>, vector<16x16xf32> -> vector<16x16xf32>
      %cst_40 = arith.constant 5.000000e-01 : f32
      %88 = vector.broadcast %cst_40 : f32 to vector<16x16xf32>
      %89 = arith.cmpf ogt, %87, %88 : vector<16x16xf32>
      %90 = arith.extui %89 : vector<16x16xi1> to vector<16x16xi32>
      %91 = arith.sitofp %90 : vector<16x16xi32> to vector<16x16xf32>
      %92 = arith.truncf %91 : vector<16x16xf32> to vector<16x16xbf16>
      %cst_41 = arith.constant dense<0.000000e+00> : vector<16x16xf32>
      %93 = tpu.matmul %92, %92, %cst_41 {dimension_numbers = #tpu.dot_dimension_numbers<[1], [0], [0], [1], [0, 0, 1, 1], [], []>} : vector<16x16xbf16>, vector<16x16xbf16>, vector<16x16xf32> -> vector<16x16xf32>
      %cst_42 = arith.constant 5.000000e-01 : f32
      %94 = vector.broadcast %cst_42 : f32 to vector<16x16xf32>
      %95 = arith.cmpf ogt, %93, %94 : vector<16x16xf32>
      %96 = arith.extui %95 : vector<16x16xi1> to vector<16x16xi32>
      %97 = arith.sitofp %96 : vector<16x16xi32> to vector<16x16xf32>
      %98 = arith.truncf %97 : vector<16x16xf32> to vector<16x16xbf16>
      %cst_43 = arith.constant 5.000000e-01 : bf16
      %99 = vector.broadcast %cst_43 : bf16 to vector<16x16xbf16>
      %100 = arith.cmpf ogt, %98, %99 : vector<16x16xbf16>
      %cst_44 = arith.constant dense<true> : vector<16x16xi1>
      %101 = arith.xori %70, %cst_44 : vector<16x16xi1>
      %102 = arith.andi %100, %101 : vector<16x16xi1>
      %103 = arith.extui %102 : vector<16x16xi1> to vector<16x16xi32>
      %104 = arith.sitofp %103 : vector<16x16xi32> to vector<16x16xf32>
      %105 = arith.truncf %104 : vector<16x16xf32> to vector<16x16xbf16>
      %c0_45 = arith.constant 0 : index
      %c0_46 = arith.constant 0 : index
      %106 = vector.load %arg7[%c0_45, %c0_46] : memref<16x16xbf16, #tpu.memory_space<vmem>>, vector<16x16xbf16>
      tpu.vector_store %arg7[%c0_45, %c0_46], %105 {strides = array<i32>} : memref<16x16xbf16, #tpu.memory_space<vmem>>, vector<16x16xbf16>,
      %c0_i32_47 = arith.constant 0 : i32
      %107 = vector.broadcast %c0_i32_47 : i32 to vector<16x1xi32>
      %108 = arith.cmpi sgt, %65, %107 : vector<16x1xi32>
      %109 = vector.broadcast %61 : vector<16x1xi32> to vector<16x16xi32>
      %110 = vector.broadcast %67 : vector<1x16xi32> to vector<16x16xi32>
      %111 = arith.cmpi eq, %109, %110 : vector<16x16xi32>
      %112 = vector.broadcast %108 : vector<16x1xi1> to vector<16x16xi1>
      %113 = arith.andi %112, %111 : vector<16x16xi1>
      %c0_i32_48 = arith.constant 0 : i32
      %114 = vector.broadcast %c0_i32_48 : i32 to vector<1x16xi32>
      %115 = arith.cmpi sgt, %63, %114 : vector<1x16xi32>
      %116 = vector.broadcast %59 : vector<1x16xi32> to vector<16x16xi32>
      %117 = vector.broadcast %66 : vector<16x1xi32> to vector<16x16xi32>
      %118 = arith.cmpi eq, %116, %117 : vector<16x16xi32>
      %119 = vector.broadcast %115 : vector<1x16xi1> to vector<16x16xi1>
      %120 = arith.andi %119, %118 : vector<16x16xi1>
      %121 = arith.ori %113, %120 : vector<16x16xi1>
      %122 = arith.ori %121, %70 : vector<16x16xi1>
      %123 = arith.extui %122 : vector<16x16xi1> to vector<16x16xi32>
      %124 = arith.sitofp %123 : vector<16x16xi32> to vector<16x16xf32>
      %125 = arith.truncf %124 : vector<16x16xf32> to vector<16x16xbf16>
      %cst_49 = arith.constant dense<0.000000e+00> : vector<16x16xf32>
      %126 = tpu.matmul %125, %125, %cst_49 {dimension_numbers = #tpu.dot_dimension_numbers<[1], [0], [0], [1], [0, 0, 1, 1], [], []>} : vector<16x16xbf16>, vector<16x16xbf16>, vector<16x16xf32> -> vector<16x16xf32>
      %cst_50 = arith.constant 5.000000e-01 : f32
      %127 = vector.broadcast %cst_50 : f32 to vector<16x16xf32>
      %128 = arith.cmpf ogt, %126, %127 : vector<16x16xf32>
      %129 = arith.extui %128 : vector<16x16xi1> to vector<16x16xi32>
      %130 = arith.sitofp %129 : vector<16x16xi32> to vector<16x16xf32>
      %131 = arith.truncf %130 : vector<16x16xf32> to vector<16x16xbf16>
      %cst_51 = arith.constant dense<0.000000e+00> : vector<16x16xf32>
      %132 = tpu.matmul %131, %131, %cst_51 {dimension_numbers = #tpu.dot_dimension_numbers<[1], [0], [0], [1], [0, 0, 1, 1], [], []>} : vector<16x16xbf16>, vector<16x16xbf16>, vector<16x16xf32> -> vector<16x16xf32>
      %cst_52 = arith.constant 5.000000e-01 : f32
      %133 = vector.broadcast %cst_52 : f32 to vector<16x16xf32>
      %134 = arith.cmpf ogt, %132, %133 : vector<16x16xf32>
      %135 = arith.extui %134 : vector<16x16xi1> to vector<16x16xi32>
      %136 = arith.sitofp %135 : vector<16x16xi32> to vector<16x16xf32>
      %137 = arith.truncf %136 : vector<16x16xf32> to vector<16x16xbf16>
      %cst_53 = arith.constant dense<0.000000e+00> : vector<16x16xf32>
      %138 = tpu.matmul %137, %137, %cst_53 {dimension_numbers = #tpu.dot_dimension_numbers<[1], [0], [0], [1], [0, 0, 1, 1], [], []>} : vector<16x16xbf16>, vector<16x16xbf16>, vector<16x16xf32> -> vector<16x16xf32>
      %cst_54 = arith.constant 5.000000e-01 : f32
      %139 = vector.broadcast %cst_54 : f32 to vector<16x16xf32>
      %140 = arith.cmpf ogt, %138, %139 : vector<16x16xf32>
      %141 = arith.extui %140 : vector<16x16xi1> to vector<16x16xi32>
      %142 = arith.sitofp %141 : vector<16x16xi32> to vector<16x16xf32>
      %143 = arith.truncf %142 : vector<16x16xf32> to vector<16x16xbf16>
      %cst_55 = arith.constant dense<0.000000e+00> : vector<16x16xf32>
      %144 = tpu.matmul %143, %143, %cst_55 {dimension_numbers = #tpu.dot_dimension_numbers<[1], [0], [0], [1], [0, 0, 1, 1], [], []>} : vector<16x16xbf16>, vector<16x16xbf16>, vector<16x16xf32> -> vector<16x16xf32>
      %cst_56 = arith.constant 5.000000e-01 : f32
      %145 = vector.broadcast %cst_56 : f32 to vector<16x16xf32>
      %146 = arith.cmpf ogt, %144, %145 : vector<16x16xf32>
      %147 = arith.extui %146 : vector<16x16xi1> to vector<16x16xi32>
      %148 = arith.sitofp %147 : vector<16x16xi32> to vector<16x16xf32>
      %149 = arith.truncf %148 : vector<16x16xf32> to vector<16x16xbf16>
      %cst_57 = arith.constant 5.000000e-01 : bf16
      %150 = vector.broadcast %cst_57 : bf16 to vector<16x16xbf16>
      %151 = arith.cmpf ogt, %149, %150 : vector<16x16xbf16>
      %cst_58 = arith.constant dense<true> : vector<16x16xi1>
      %152 = arith.xori %70, %cst_58 : vector<16x16xi1>
      %153 = arith.andi %151, %152 : vector<16x16xi1>
      %154 = arith.extui %153 : vector<16x16xi1> to vector<16x16xi32>
      %155 = arith.sitofp %154 : vector<16x16xi32> to vector<16x16xf32>
      %156 = arith.truncf %155 : vector<16x16xf32> to vector<16x16xbf16>
      %c0_59 = arith.constant 0 : index
      %c0_60 = arith.constant 0 : index
      %157 = vector.load %arg8[%c0_59, %c0_60] : memref<16x16xbf16, #tpu.memory_space<vmem>>, vector<16x16xbf16>
      tpu.vector_store %arg8[%c0_59, %c0_60], %156 {strides = array<i32>} : memref<16x16xbf16, #tpu.memory_space<vmem>>, vector<16x16xbf16>,
    } else {
    }
    %c16_i32 = arith.constant 16 : i32
    %3 = arith.muli %arg1, %c16_i32 : i32
    %4 = tpu.assume_multiple %3, 16 : i32
    %5 = tpu.iota {dimensions = array<i32: 0>} : vector<16x16xi32>
    %6 = vector.broadcast %4 : i32 to vector<16x16xi32>
    %7 = arith.addi %5, %6 : vector<16x16xi32>
    %8 = tpu.iota {dimensions = array<i32: 1>} : vector<16x16xi32>
    %c0 = arith.constant 0 : index
    %c0_1 = arith.constant 0 : index
    %c0_2 = arith.constant 0 : index
    %9 = vector.load %arg2[%c0, %c0_1, %c0_2] : memref<1x1x16xi32, #tpu.memory_space<vmem>>, vector<1x1x16xi32>
    %10 = vector.shape_cast %9 : vector<1x1x16xi32> to vector<1x16xi32>
    %c0_3 = arith.constant 0 : index
    %11 = arith.index_cast %4 : i32 to index
    %c0_4 = arith.constant 0 : index
    %12 = vector.load %arg3[%c0_3, %11, %c0_4] : memref<1x16x1xi32, #tpu.memory_space<vmem>>, vector<1x16x1xi32>
    %13 = vector.shape_cast %12 : vector<1x16x1xi32> to vector<16x1xi32>
    %14 = vector.broadcast %10 : vector<1x16xi32> to vector<16x16xi32>
    %15 = arith.cmpi eq, %14, %7 : vector<16x16xi32>
    %16 = arith.cmpi ne, %8, %7 : vector<16x16xi32>
    %17 = arith.andi %15, %16 : vector<16x16xi1>
    %18 = arith.extui %17 : vector<16x16xi1> to vector<16x16xi32>
    %19 = arith.sitofp %18 : vector<16x16xi32> to vector<16x16xf32>
    %20 = arith.truncf %19 : vector<16x16xf32> to vector<16x16xbf16>
    %c0_5 = arith.constant 0 : index
    %c0_6 = arith.constant 0 : index
    %c0_7 = arith.constant 0 : index
    %c0_8 = arith.constant 0 : index
    %21 = vector.load %arg6[%c0_5, %c0_6, %c0_7, %c0_8] : memref<1x6x16x16xbf16, #tpu.memory_space<vmem>>, vector<1x1x16x16xbf16>
    %22 = vector.shape_cast %21 : vector<1x1x16x16xbf16> to vector<16x16xbf16>
    %23 = vector.shape_cast %20 : vector<16x16xbf16> to vector<1x1x16x16xbf16>
    tpu.vector_store %arg6[%c0_5, %c0_6, %c0_7, %c0_8], %23 {strides = array<i32>} : memref<1x6x16x16xbf16, #tpu.memory_space<vmem>>, vector<1x1x16x16xbf16>,
    %24 = arith.cmpi slt, %8, %7 : vector<16x16xi32>
    %25 = arith.andi %17, %24 : vector<16x16xi1>
    %26 = arith.extui %25 : vector<16x16xi1> to vector<16x16xi32>
    %27 = arith.sitofp %26 : vector<16x16xi32> to vector<16x16xf32>
    %28 = arith.truncf %27 : vector<16x16xf32> to vector<16x16xbf16>
    %c0_9 = arith.constant 0 : index
    %c1 = arith.constant 1 : index
    %c0_10 = arith.constant 0 : index
    %c0_11 = arith.constant 0 : index
    %29 = vector.load %arg6[%c0_9, %c1, %c0_10, %c0_11] : memref<1x6x16x16xbf16, #tpu.memory_space<vmem>>, vector<1x1x16x16xbf16>
    %30 = vector.shape_cast %29 : vector<1x1x16x16xbf16> to vector<16x16xbf16>
    %31 = vector.shape_cast %28 : vector<16x16xbf16> to vector<1x1x16x16xbf16>
    tpu.vector_store %arg6[%c0_9, %c1, %c0_10, %c0_11], %31 {strides = array<i32>} : memref<1x6x16x16xbf16, #tpu.memory_space<vmem>>, vector<1x1x16x16xbf16>,
    %32 = arith.cmpi sgt, %8, %7 : vector<16x16xi32>
    %33 = arith.andi %17, %32 : vector<16x16xi1>
    %34 = arith.extui %33 : vector<16x16xi1> to vector<16x16xi32>
    %35 = arith.sitofp %34 : vector<16x16xi32> to vector<16x16xf32>
    %36 = arith.truncf %35 : vector<16x16xf32> to vector<16x16xbf16>
    %c0_12 = arith.constant 0 : index
    %c2 = arith.constant 2 : index
    %c0_13 = arith.constant 0 : index
    %c0_14 = arith.constant 0 : index
    %37 = vector.load %arg6[%c0_12, %c2, %c0_13, %c0_14] : memref<1x6x16x16xbf16, #tpu.memory_space<vmem>>, vector<1x1x16x16xbf16>
    %38 = vector.shape_cast %37 : vector<1x1x16x16xbf16> to vector<16x16xbf16>
    %39 = vector.shape_cast %36 : vector<16x16xbf16> to vector<1x1x16x16xbf16>
    tpu.vector_store %arg6[%c0_12, %c2, %c0_13, %c0_14], %39 {strides = array<i32>} : memref<1x6x16x16xbf16, #tpu.memory_space<vmem>>, vector<1x1x16x16xbf16>,
    %40 = arith.index_cast %4 : i32 to index
    %c0_15 = arith.constant 0 : index
    %41 = vector.load %arg8[%40, %c0_15] : memref<16x16xbf16, #tpu.memory_space<vmem>>, vector<16x16xbf16>
    %c0_16 = arith.constant 0 : index
    %c3 = arith.constant 3 : index
    %c0_17 = arith.constant 0 : index
    %c0_18 = arith.constant 0 : index
    %42 = vector.load %arg6[%c0_16, %c3, %c0_17, %c0_18] : memref<1x6x16x16xbf16, #tpu.memory_space<vmem>>, vector<1x1x16x16xbf16>
    %43 = vector.shape_cast %42 : vector<1x1x16x16xbf16> to vector<16x16xbf16>
    %44 = vector.shape_cast %41 : vector<16x16xbf16> to vector<1x1x16x16xbf16>
    tpu.vector_store %arg6[%c0_16, %c3, %c0_17, %c0_18], %44 {strides = array<i32>} : memref<1x6x16x16xbf16, #tpu.memory_space<vmem>>, vector<1x1x16x16xbf16>,
    %45 = vector.broadcast %13 : vector<16x1xi32> to vector<16x16xi32>
    %46 = arith.cmpi eq, %45, %8 : vector<16x16xi32>
    %47 = arith.extui %46 : vector<16x16xi1> to vector<16x16xi32>
    %48 = arith.sitofp %47 : vector<16x16xi32> to vector<16x16xf32>
    %49 = arith.truncf %48 : vector<16x16xf32> to vector<16x16xbf16>
    %c0_19 = arith.constant 0 : index
    %c4 = arith.constant 4 : index
    %c0_20 = arith.constant 0 : index
    %c0_21 = arith.constant 0 : index
    %50 = vector.load %arg6[%c0_19, %c4, %c0_20, %c0_21] : memref<1x6x16x16xbf16, #tpu.memory_space<vmem>>, vector<1x1x16x16xbf16>
    %51 = vector.shape_cast %50 : vector<1x1x16x16xbf16> to vector<16x16xbf16>
    %52 = vector.shape_cast %49 : vector<16x16xbf16> to vector<1x1x16x16xbf16>
    tpu.vector_store %arg6[%c0_19, %c4, %c0_20, %c0_21], %52 {strides = array<i32>} : memref<1x6x16x16xbf16, #tpu.memory_space<vmem>>, vector<1x1x16x16xbf16>,
    %53 = arith.index_cast %4 : i32 to index
    %c0_22 = arith.constant 0 : index
    %54 = vector.load %arg7[%53, %c0_22] : memref<16x16xbf16, #tpu.memory_space<vmem>>, vector<16x16xbf16>
    %c0_23 = arith.constant 0 : index
    %c5 = arith.constant 5 : index
    %c0_24 = arith.constant 0 : index
    %c0_25 = arith.constant 0 : index
    %55 = vector.load %arg6[%c0_23, %c5, %c0_24, %c0_25] : memref<1x6x16x16xbf16, #tpu.memory_space<vmem>>, vector<1x1x16x16xbf16>
    %56 = vector.shape_cast %55 : vector<1x1x16x16xbf16> to vector<16x16xbf16>
    %57 = vector.shape_cast %54 : vector<16x16xbf16> to vector<1x1x16x16xbf16>
    tpu.vector_store %arg6[%c0_23, %c5, %c0_24, %c0_25], %57 {strides = array<i32>} : memref<1x6x16x16xbf16, #tpu.memory_space<vmem>>, vector<1x1x16x16xbf16>,
    return
  }
  func.func @transform_0(%arg0: i32, %arg1: i32) -> (i32, i32, i32) {
    %c0_i32 = arith.constant 0 : i32
    %c0_i32_0 = arith.constant 0 : i32
    %c0_i32_1 = arith.constant 0 : i32
    return %arg0, %c0_i32, %c0_i32_0 : i32, i32, i32
  }
  func.func @transform_1(%arg0: i32, %arg1: i32) -> (i32, i32, i32) {
    %c0_i32 = arith.constant 0 : i32
    %c0_i32_0 = arith.constant 0 : i32
    %c0_i32_1 = arith.constant 0 : i32
    return %arg0, %c0_i32, %c0_i32_0 : i32, i32, i32
  }
  func.func @transform_2(%arg0: i32, %arg1: i32) -> (i32, i32, i32) {
    %c0_i32 = arith.constant 0 : i32
    %c0_i32_0 = arith.constant 0 : i32
    %c0_i32_1 = arith.constant 0 : i32
    return %arg0, %c0_i32, %c0_i32_0 : i32, i32, i32
  }
  func.func @transform_3(%arg0: i32, %arg1: i32) -> (i32, i32, i32) {
    %c0_i32 = arith.constant 0 : i32
    %c0_i32_0 = arith.constant 0 : i32
    %c0_i32_1 = arith.constant 0 : i32
    return %arg0, %c0_i32, %c0_i32_0 : i32, i32, i32
  }
  func.func @transform_4(%arg0: i32, %arg1: i32) -> (i32, i32, i32, i32) {
    %c0_i32 = arith.constant 0 : i32
    %c0_i32_0 = arith.constant 0 : i32
    %c0_i32_1 = arith.constant 0 : i32
    return %arg0, %c0_i32, %arg1, %c0_i32_0 : i32, i32, i32, i32
  }
}

</mosaic_0001>

<llo_original>
// kernel: tpu_custom_call.1
$region0: #{tpu_custom_call.1}
  #allocation0 [shape = 'u32[]', space=smem, size = 0x4, offset = 0x4, fixed_abs, tag = 'smem constant byte address 0x4 - core index']
  #allocation1 [shape = 'u32[144,128]{1,0:T(1,128)}', space=vmem, size = 0x12000, scoped, tag = 'internal scratch']
  #allocation2 [shape = 'bf16[16,16]{1,0:T(16,128)(2,1)}', space=vmem, size = 0x1000, scoped, tag = 'scratch operand']
  #allocation3 [shape = 'bf16[16,16]{1,0:T(16,128)(2,1)}', space=vmem, size = 0x1000, scoped, tag = 'scratch operand']
  %s0 = inlined_call_operand.vmem [shape: s32[2,1,16], index: 0, kind: input, shape index: {}]
  %s1 = inlined_call_operand.vmem [shape: s32[2,16,1], index: 1, kind: input, shape index: {}]
  %s2 = inlined_call_operand.vmem [shape: s32[2,1,16], index: 2, kind: input, shape index: {}]
  %s3 = inlined_call_operand.vmem [shape: s32[2,16,1], index: 3, kind: input, shape index: {}]
  %s4 = inlined_call_operand.hbm [shape: bf16[2,6,16,16], index: 4, kind: output, shape index: {}]
  %s5 = sld [smem:[#allocation0]]
  $region53: #{tpu_custom_call.1} parent=0
    _
  %s7 = ssub.s32 1, %s5
  %s8 = scalar_select 0, %s7, %s5
  $region1: #{tpu_custom_call.1} parent=0
    #allocation4 [shape = 'u8[49152]{0}', space=vmem, size = 0xc000, scoped, tag = 'output window, operand 0']
    #allocation5 [shape = 's32[2]{0}', space=sflag, size = 0x8, scoped, tag = 'scoped memory for tpu_custom_call.1']
    %9 = vsyncpa [#allocation5], 0
    %s10 = scalar_lea.sflag [#allocation5], 1
    %11 = vsyncpa %s10, 0
    loop: start=0, step=1, limit=4
    $region2: #{tpu_custom_call.1} parent=1 // loop_pre_header
      _
    $region3: #{tpu_custom_call.1} parent=1 // loop_header
      %s13 = sphi 0, %s17
      %p14 = scmp.ge.s32.totalorder %s13, 4
      %s20 = sphi 0, %s32
      %s21 = sphi 0, %s28
      %s22 = sphi 0, %s20
      %s23 = sphi 0, %s21
      %s24 = sphi 0, %s22
      %s25 = sphi 0, %s23
      %s35 = sphi 0, %s37
      %s38 = sphi 0, %s35
      %s39 = sphi 0, %s38
      %s55 = sphi 0, %s39
      %s61 = sphi 0, %s63
      %s64 = sphi 0, %s61
      %s65 = sphi 0, %s64
      %s81 = sphi 0, %s65
      %s87 = sphi 0, %s89
      %s90 = sphi 0, %s87
      %s91 = sphi 0, %s90
      %s107 = sphi 0, %s91
      %s113 = sphi 0, %s115
      %s116 = sphi 0, %s113
      %s117 = sphi 0, %s116
      %s133 = sphi 0, %s117
      %s141 = sphi 0, %s143
      %s144 = sphi 0, %s141
      %s145 = sphi 0, %s144
      %s161 = sphi 0, %s145
    $region4: #{tpu_custom_call.1} parent=1 // loop_header_branch
      %16 = sbr.rel (%p14) target = $region8
    $region5: #{tpu_custom_call.1} parent=1 // loop_body
      %s18 = ssub.s32 %s13, 1
      %s19 = ssub.s32 %s13, 2
      %s26 = sadd.s32 1, %s21
      %p27 = scmp.ge.s32.totalorder %s26, 1
      %s28 = scalar_select %p27, 0, %s26
      %s29 = sadd.s32 1, %s20
      %s30 = scalar_select %p27, %s29, %s20
      %p31 = scmp.ge.s32.totalorder %s30, 2
      %s32 = scalar_select %p31, 0, %s30
      %s33 = ssub.s32 %s20, %s32
      %p34 = scmp.eq.s32.totalorder %s33, 0
      %s36 = sadd.s32 %s35, 1
      %s37 = scalar_select %p34, %s35, %s36
      %p40 = pneg %p34
      %p41 = scmp.eq.s32.totalorder %s13, 1
      %p42 = por %p40, %p41
      %p43 = scmp.ne.s32.totalorder %s35, %s38
      %p44 = scmp.eq.s32.totalorder %s13, 0
      %p45 = por %p43, %p44
      %p46 = scmp.ne.s32.totalorder %s35, %s38
      %p47 = scmp.eq.s32.totalorder %s18, 1
      %p48 = por %p46, %p47
      %p49 = scmp.ne.s32.totalorder %s38, %s39
      %p50 = scmp.eq.s32.totalorder %s18, 0
      %p51 = por %p49, %p50
      %p52 = scmp.ne.s32.totalorder %s38, %s39
      %p53 = scmp.eq.s32.totalorder %s19, 1
      %p54 = por %p52, %p53
      %p56 = scmp.ne.s32.totalorder %s39, %s55
      %p57 = scmp.eq.s32.totalorder %s19, 0
      %p58 = por %p56, %p57
      %s59 = ssub.s32 %s20, %s32
      %p60 = scmp.eq.s32.totalorder %s59, 0
      %s62 = sadd.s32 %s61, 1
      %s63 = scalar_select %p60, %s61, %s62
      %p66 = pneg %p60
      %p67 = scmp.eq.s32.totalorder %s13, 1
      %p68 = por %p66, %p67
      %p69 = scmp.ne.s32.totalorder %s61, %s64
      %p70 = scmp.eq.s32.totalorder %s13, 0
      %p71 = por %p69, %p70
      %p72 = scmp.ne.s32.totalorder %s61, %s64
      %p73 = scmp.eq.s32.totalorder %s18, 1
      %p74 = por %p72, %p73
      %p75 = scmp.ne.s32.totalorder %s64, %s65
      %p76 = scmp.eq.s32.totalorder %s18, 0
      %p77 = por %p75, %p76
      %p78 = scmp.ne.s32.totalorder %s64, %s65
      %p79 = scmp.eq.s32.totalorder %s19, 1
      %p80 = por %p78, %p79
      %p82 = scmp.ne.s32.totalorder %s65, %s81
      %p83 = scmp.eq.s32.totalorder %s19, 0
      %p84 = por %p82, %p83
      %s85 = ssub.s32 %s20, %s32
      %p86 = scmp.eq.s32.totalorder %s85, 0
      %s88 = sadd.s32 %s87, 1
      %s89 = scalar_select %p86, %s87, %s88
      %p92 = pneg %p86
      %p93 = scmp.eq.s32.totalorder %s13, 1
      %p94 = por %p92, %p93
      %p95 = scmp.ne.s32.totalorder %s87, %s90
      %p96 = scmp.eq.s32.totalorder %s13, 0
      %p97 = por %p95, %p96
      %p98 = scmp.ne.s32.totalorder %s87, %s90
      %p99 = scmp.eq.s32.totalorder %s18, 1
      %p100 = por %p98, %p99
      %p101 = scmp.ne.s32.totalorder %s90, %s91
      %p102 = scmp.eq.s32.totalorder %s18, 0
      %p103 = por %p101, %p102
      %p104 = scmp.ne.s32.totalorder %s90, %s91
      %p105 = scmp.eq.s32.totalorder %s19, 1
      %p106 = por %p104, %p105
      %p108 = scmp.ne.s32.totalorder %s91, %s107
      %p109 = scmp.eq.s32.totalorder %s19, 0
      %p110 = por %p108, %p109
      %s111 = ssub.s32 %s20, %s32
      %p112 = scmp.eq.s32.totalorder %s111, 0
      %s114 = sadd.s32 %s113, 1
      %s115 = scalar_select %p112, %s113, %s114
      %p118 = pneg %p112
      %p119 = scmp.eq.s32.totalorder %s13, 1
      %p120 = por %p118, %p119
      %p121 = scmp.ne.s32.totalorder %s113, %s116
      %p122 = scmp.eq.s32.totalorder %s13, 0
      %p123 = por %p121, %p122
      %p124 = scmp.ne.s32.totalorder %s113, %s116
      %p125 = scmp.eq.s32.totalorder %s18, 1
      %p126 = por %p124, %p125
      %p127 = scmp.ne.s32.totalorder %s116, %s117
      %p128 = scmp.eq.s32.totalorder %s18, 0
      %p129 = por %p127, %p128
      %p130 = scmp.ne.s32.totalorder %s116, %s117
      %p131 = scmp.eq.s32.totalorder %s19, 1
      %p132 = por %p130, %p131
      %p134 = scmp.ne.s32.totalorder %s117, %s133
      %p135 = scmp.eq.s32.totalorder %s19, 0
      %p136 = por %p134, %p135
      %s137 = ssub.s32 %s20, %s32
      %s138 = ssub.s32 %s21, %s28
      %s139 = sor.u32 %s137, %s138
      %p140 = scmp.eq.s32.totalorder %s139, 0
      %s142 = sadd.s32 %s141, 1
      %s143 = scalar_select %p140, %s141, %s142
      %p146 = pneg %p140
      %p147 = scmp.eq.s32.totalorder %s13, 1
      %p148 = por %p146, %p147
      %p149 = scmp.ne.s32.totalorder %s141, %s144
      %p150 = scmp.eq.s32.totalorder %s13, 0
      %p151 = por %p149, %p150
      %p152 = scmp.ne.s32.totalorder %s141, %s144
      %p153 = scmp.eq.s32.totalorder %s18, 1
      %p154 = por %p152, %p153
      %p155 = scmp.ne.s32.totalorder %s144, %s145
      %p156 = scmp.eq.s32.totalorder %s18, 0
      %p157 = por %p155, %p156
      %p158 = scmp.ne.s32.totalorder %s144, %s145
      %p159 = scmp.eq.s32.totalorder %s19, 1
      %p160 = por %p158, %p159
      %p162 = scmp.ne.s32.totalorder %s145, %s161
      %p163 = scmp.eq.s32.totalorder %s19, 0
      %p164 = por %p162, %p163
      %p165 = scmp.le.s32.totalorder 1, %s13
      %p166 = scmp.lt.s32.totalorder %s13, 3
      %p167 = pnand %p165, %p166
      %p168 = pneg %p167
      // Predicated region
      $region9: #{tpu_custom_call.1} parent=5 // pred_check
        _
      $region10: #{tpu_custom_call.1} parent=5 // pred_check_branch
        %170 = sbr.rel (%p167) target = $region12
      $region11: #{tpu_custom_call.1} parent=5 // pred_region
        %s171 = ssub.s32 %s13, 1
      $region12: #{tpu_custom_call.1} parent=5 // pred_fallthru
        _
      %p172 = scmp.lt.s32.totalorder %s13, 2
      // Predicated region
      $region13: #{tpu_custom_call.1} parent=5 // pred_check
        %p173 = pneg %p172
      $region14: #{tpu_custom_call.1} parent=5 // pred_check_branch
        %175 = sbr.rel (%p173) target = $region16
      $region15: #{tpu_custom_call.1} parent=5 // pred_region
        // Predicated region
        $region17: #{tpu_custom_call.1} parent=15 // pred_check
          %p176 = pneg %p45
        $region18: #{tpu_custom_call.1} parent=15 // pred_check_branch
          %178 = sbr.rel (%p176) target = $region20
        $region19: #{tpu_custom_call.1} parent=15 // pred_region
          %p179 = scmp.lt.s32.totalorder %s20, 1
          %s180 = scalar_select %p179, %s20, 1
          %s181 = scalar_lea.vmem %s0, %s180
        $region20: #{tpu_custom_call.1} parent=15 // pred_fallthru
          _
        // Predicated region
        $region21: #{tpu_custom_call.1} parent=15 // pred_check
          %p182 = pneg %p71
        $region22: #{tpu_custom_call.1} parent=15 // pred_check_branch
          %184 = sbr.rel (%p182) target = $region24
        $region23: #{tpu_custom_call.1} parent=15 // pred_region
          %p185 = scmp.lt.s32.totalorder %s20, 1
          %s186 = scalar_select %p185, %s20, 1
          %s187 = smul.addr %s186, 2
          %s188 = smul.addr %s187, 8
          %s189 = scalar_lea.vmem %s1, %s188
        $region24: #{tpu_custom_call.1} parent=15 // pred_fallthru
          _
        // Predicated region
        $region25: #{tpu_custom_call.1} parent=15 // pred_check
          %p190 = pneg %p97
        $region26: #{tpu_custom_call.1} parent=15 // pred_check_branch
          %192 = sbr.rel (%p190) target = $region28
        $region27: #{tpu_custom_call.1} parent=15 // pred_region
          %p193 = scmp.lt.s32.totalorder %s20, 1
          %s194 = scalar_select %p193, %s20, 1
          %s195 = scalar_lea.vmem %s2, %s194
        $region28: #{tpu_custom_call.1} parent=15 // pred_fallthru
          _
        // Predicated region
        $region29: #{tpu_custom_call.1} parent=15 // pred_check
          %p196 = pneg %p123
        $region30: #{tpu_custom_call.1} parent=15 // pred_check_branch
          %198 = sbr.rel (%p196) target = $region32
        $region31: #{tpu_custom_call.1} parent=15 // pred_region
          %p199 = scmp.lt.s32.totalorder %s20, 1
          %s200 = scalar_select %p199, %s20, 1
          %s201 = smul.addr %s200, 2
          %s202 = smul.addr %s201, 8
          %s203 = scalar_lea.vmem %s3, %s202
        $region32: #{tpu_custom_call.1} parent=15 // pred_fallthru
          _
      $region16: #{tpu_custom_call.1} parent=5 // pred_fallthru
        _
      %p204 = scmp.le.s32.totalorder 1, %s13
      %p205 = scmp.lt.s32.totalorder %s13, 3
      %p206 = pnand %p204, %p205
      %p207 = pneg %p206
      // Predicated region
      $region33: #{tpu_custom_call.1} parent=5 // pred_check
        _
      $region34: #{tpu_custom_call.1} parent=5 // pred_check_branch
        %209 = sbr.rel (%p206) target = $region36
      $region35: #{tpu_custom_call.1} parent=5 // pred_region
        %s210 = ssub.s32 %s13, 1
        %p211 = scmp.lt.s32.totalorder %s22, 1
        %s212 = scalar_select %p211, %s22, 1
        %s213 = scalar_lea.vmem %s0, %s212
        %p214 = pneg %p51
        %p215 = pneg %p48
        %p216 = scmp.lt.s32.totalorder %s22, 1
        %s217 = scalar_select %p216, %s22, 1
        %s218 = smul.addr %s217, 2
        %s219 = smul.addr %s218, 8
        %s220 = scalar_lea.vmem %s1, %s219
        %p221 = pneg %p77
        %p222 = pneg %p74
        %p223 = scmp.lt.s32.totalorder %s22, 1
        %s224 = scalar_select %p223, %s22, 1
        %s225 = scalar_lea.vmem %s2, %s224
        %p226 = pneg %p103
        %p227 = pneg %p100
        %p228 = scmp.lt.s32.totalorder %s22, 1
        %s229 = scalar_select %p228, %s22, 1
        %s230 = smul.addr %s229, 2
        %s231 = smul.addr %s230, 8
        %s232 = scalar_lea.vmem %s3, %s231
        %p233 = pneg %p129
        %p234 = pneg %p126
        %p235 = pneg %p157
        %p236 = pneg %p154
        %s237 = sand.u32 %s144, 1
        %s238 = scalar_lea.sflag [#allocation5], %s237
        %s239 = sand.u32 %s144, 1
        %s240 = smul.addr %s239, 48
        %s241 = scalar_lea.vmem [#allocation4], %s240
        %p242 = scmp.lt.s32.totalorder %s22, 1
        %s243 = scalar_select %p242, %s22, 1
        %s244 = scalar_lea.vmem %s0, %s243
        %p245 = scmp.lt.s32.totalorder %s22, 1
        %s246 = scalar_select %p245, %s22, 1
        %s247 = smul.addr %s246, 2
        %s248 = smul.addr %s247, 8
        %s249 = scalar_lea.vmem %s1, %s248
        %p250 = scmp.lt.s32.totalorder %s22, 1
        %s251 = scalar_select %p250, %s22, 1
        %s252 = scalar_lea.vmem %s2, %s251
        %p253 = scmp.lt.s32.totalorder %s22, 1
        %s254 = scalar_select %p253, %s22, 1
        %s255 = smul.addr %s254, 2
        %s256 = smul.addr %s255, 8
        %s257 = scalar_lea.vmem %s3, %s256
        %s258 = smul.u32 2, %s23
        %p263 = scmp.eq.s32.totalorder %s23, 0
        // Predicated region
        $region37: #{tpu_custom_call.1} parent=35 // pred_check
          %p264 = pneg %p263
        $region38: #{tpu_custom_call.1} parent=35 // pred_check_branch
          %266 = sbr.rel (%p264) target = $region40
        $region39: #{tpu_custom_call.1} parent=35 // pred_region
          %v267 = vld [vmem:[%s244] sm:$0x1]
          %v268 = vld [vmem:[%s249] sm:$0xff]
          %v269 = vld [vmem:[%s249 + $0x8] sm:$0xff]
          %v270 = vld [vmem:[%s252] sm:$0x1]
          %v271 = vld [vmem:[%s257] sm:$0xff]
          %v272 = vld [vmem:[%s257 + $0x8] sm:$0xff]
          %v273 = vlaneseq
          %v274 = vshrl.u32 %v273, 7
          %v275 = vadd.s32 %v274, 8
          %v276 = vlaneseq
          %v277 = vand.u32 %v276, 127
          %vm278 = vcmp.eq.s32.totalorder %v274, %v277
          %vm279 = vcmp.eq.s32.totalorder %v275, %v277
          %280 = vset.pattern.permute.xlu0 0
          %281 = vperm.xlu0 %280, %v268
          %v282 = vpop.permute.xlu0 %281
          %283 = vset.pattern.permute.xlu0 0
          %284 = vperm.xlu0 %283, %v269
          %v285 = vpop.permute.xlu0 %284
          %vm286 = vcmp.eq.s32.totalorder %v282, %v277
          %vm287 = vcmp.eq.s32.totalorder %v285, %v277
          %vm288 = vcmp.ne.s32.totalorder %v268, %v274
          %vm289 = vcmp.ne.s32.totalorder %v269, %v275
          %v290 = vsel %vm288, 1, 0
          %v291 = vsel %vm289, 1, 0
          %292 = vset.pattern.permute.xlu0 0
          %293 = vperm.xlu0 %292, %v290
          %v294 = vpop.permute.xlu0 %293
          %295 = vset.pattern.permute.xlu0 0
          %296 = vperm.xlu0 %295, %v291
          %v297 = vpop.permute.xlu0 %296
          %vm298 = vcmp.eq.s32.totalorder %v294, 1
          %vm299 = vcmp.eq.s32.totalorder %v297, 1
          %vm300 = vmand %vm286, %vm298
          %vm301 = vmand %vm287, %vm299
          %vm302 = vmor %vm300, %vm278
          %vm303 = vmor %vm301, %vm279
          %v304 = vsel %vm302, 1, 0
          %v305 = vsel %vm303, 1, 0
          %v306 = vcvt.s32.f32 %v304
          %v307 = vcvt.s32.f32 %v305
          %v308 = vpack.c.bf16 %v307, %v306
          %vm309 = vcmask 130048
          %v311 = vsel %vm309, %v308, 0
          %313 = vmatprep.subr.bf16.mxu0 0
          %314 = vmatpush1.bf16.msra.mxu0 %v308
          %315 = vmatprep.subr.bf16.mxu0 0
          %316 = vmatpush1.bf16.msra.mxu0 0
          %317 = vmatprep.subr.bf16.mxu0 0
          %318 = vmatpush1.bf16.msra.mxu0 0
          %319 = vmatprep.subr.bf16.mxu0 0
          %320 = vmatpush1.bf16.msra.mxu0 0
          %321 = vmatprep.subr.bf16.mxu0 0
          %322 = vmatpush1.bf16.msra.mxu0 0
          %323 = vmatprep.subr.bf16.mxu0 0
          %324 = vmatpush1.bf16.msra.mxu0 0
          %325 = vmatprep.subr.bf16.mxu0 0
          %326 = vmatpush1.bf16.msra.mxu0 0
          %327 = vmatprep.subr.bf16.mxu0 0
          %328 = vmatpush1.bf16.msra.mxu0 0
          %329 = vmatprep.subr.bf16.mxu0 0
          %330 = vmatpush1.bf16.msra.mxu0 0
          %331 = vmatprep.subr.bf16.mxu0 0
          %332 = vmatpush1.bf16.msra.mxu0 0
          %333 = vmatprep.subr.bf16.mxu0 0
          %334 = vmatpush1.bf16.msra.mxu0 0
          %335 = vmatprep.subr.bf16.mxu0 0
          %336 = vmatpush1.bf16.msra.mxu0 0
          %337 = vmatprep.subr.bf16.mxu0 0
          %338 = vmatpush1.bf16.msra.mxu0 0
          %339 = vmatprep.subr.bf16.mxu0 0
          %340 = vmatpush1.bf16.msra.mxu0 0
          %341 = vmatprep.subr.bf16.mxu0 0
          %342 = vmatpush1.bf16.msra.mxu0 0
          %343 = vmatprep.subr.bf16.mxu0 0
          %344 = vmatpush1.bf16.msra.mxu0 0
          %345 = vmatprep.mubr.bf16.mxu0 0
          %346 = vmatmul.mubr.bf16.gmra.mrb[0].mxu0 %v311
          %v347 = vpop.f32.mrb[0].mxu0
          %v348 = vadd.f32 0.0, %v347
          %v349 = vpop.f32.mrb[0].mxu0
          %v350 = vpop.f32.mrb[0].mxu0
          %v351 = vadd.f32 0.0, %v350
          %v352 = vpop.f32.mrb[0].mxu0
          %353 = vdwg.mxu0
          %vm354 = vcmp.gt.f32.partialorder %v348, 0.5
          %vm355 = vcmp.gt.f32.partialorder %v351, 0.5
          %v356 = vsel %vm354, 1, 0
          %v357 = vsel %vm355, 1, 0
          %v358 = vcvt.s32.f32 %v356
          %v359 = vcvt.s32.f32 %v357
          %v360 = vpack.c.bf16 %v359, %v358
          %v362 = vsel %vm309, %v360, 0
          %364 = vmatprep.subr.bf16.mxu0 0
          %365 = vmatpush1.bf16.msra.mxu0 %v360
          %366 = vmatprep.subr.bf16.mxu0 0
          %367 = vmatpush1.bf16.msra.mxu0 0
          %368 = vmatprep.subr.bf16.mxu0 0
          %369 = vmatpush1.bf16.msra.mxu0 0
          %370 = vmatprep.subr.bf16.mxu0 0
          %371 = vmatpush1.bf16.msra.mxu0 0
          %372 = vmatprep.subr.bf16.mxu0 0
          %373 = vmatpush1.bf16.msra.mxu0 0
          %374 = vmatprep.subr.bf16.mxu0 0
          %375 = vmatpush1.bf16.msra.mxu0 0
          %376 = vmatprep.subr.bf16.mxu0 0
          %377 = vmatpush1.bf16.msra.mxu0 0
          %378 = vmatprep.subr.bf16.mxu0 0
          %379 = vmatpush1.bf16.msra.mxu0 0
          %380 = vmatprep.subr.bf16.mxu0 0
          %381 = vmatpush1.bf16.msra.mxu0 0
          %382 = vmatprep.subr.bf16.mxu0 0
          %383 = vmatpush1.bf16.msra.mxu0 0
          %384 = vmatprep.subr.bf16.mxu0 0
          %385 = vmatpush1.bf16.msra.mxu0 0
          %386 = vmatprep.subr.bf16.mxu0 0
          %387 = vmatpush1.bf16.msra.mxu0 0
          %388 = vmatprep.subr.bf16.mxu0 0
          %389 = vmatpush1.bf16.msra.mxu0 0
          %390 = vmatprep.subr.bf16.mxu0 0
          %391 = vmatpush1.bf16.msra.mxu0 0
          %392 = vmatprep.subr.bf16.mxu0 0
          %393 = vmatpush1.bf16.msra.mxu0 0
          %394 = vmatprep.subr.bf16.mxu0 0
          %395 = vmatpush1.bf16.msra.mxu0 0
          %396 = vmatprep.mubr.bf16.mxu0 0
          %397 = vmatmul.mubr.bf16.gmra.mrb[0].mxu0 %v362
          %v398 = vpop.f32.mrb[0].mxu0
          %v399 = vadd.f32 0.0, %v398
          %v400 = vpop.f32.mrb[0].mxu0
          %v401 = vpop.f32.mrb[0].mxu0
          %v402 = vadd.f32 0.0, %v401
          %v403 = vpop.f32.mrb[0].mxu0
          %404 = vdwg.mxu0
          %vm405 = vcmp.gt.f32.partialorder %v399, 0.5
          %vm406 = vcmp.gt.f32.partialorder %v402, 0.5
          %v407 = vsel %vm405, 1, 0
          %v408 = vsel %vm406, 1, 0
          %v409 = vcvt.s32.f32 %v407
          %v410 = vcvt.s32.f32 %v408
          %v411 = vpack.c.bf16 %v410, %v409
          %v413 = vsel %vm309, %v411, 0
          %415 = vmatprep.subr.bf16.mxu0 0
          %416 = vmatpush1.bf16.msra.mxu0 %v411
          %417 = vmatprep.subr.bf16.mxu0 0
          %418 = vmatpush1.bf16.msra.mxu0 0
          %419 = vmatprep.subr.bf16.mxu0 0
          %420 = vmatpush1.bf16.msra.mxu0 0
          %421 = vmatprep.subr.bf16.mxu0 0
          %422 = vmatpush1.bf16.msra.mxu0 0
          %423 = vmatprep.subr.bf16.mxu0 0
          %424 = vmatpush1.bf16.msra.mxu0 0
          %425 = vmatprep.subr.bf16.mxu0 0
          %426 = vmatpush1.bf16.msra.mxu0 0
          %427 = vmatprep.subr.bf16.mxu0 0
          %428 = vmatpush1.bf16.msra.mxu0 0
          %429 = vmatprep.subr.bf16.mxu0 0
          %430 = vmatpush1.bf16.msra.mxu0 0
          %431 = vmatprep.subr.bf16.mxu0 0
          %432 = vmatpush1.bf16.msra.mxu0 0
          %433 = vmatprep.subr.bf16.mxu0 0
          %434 = vmatpush1.bf16.msra.mxu0 0
          %435 = vmatprep.subr.bf16.mxu0 0
          %436 = vmatpush1.bf16.msra.mxu0 0
          %437 = vmatprep.subr.bf16.mxu0 0
          %438 = vmatpush1.bf16.msra.mxu0 0
          %439 = vmatprep.subr.bf16.mxu0 0
          %440 = vmatpush1.bf16.msra.mxu0 0
          %441 = vmatprep.subr.bf16.mxu0 0
          %442 = vmatpush1.bf16.msra.mxu0 0
          %443 = vmatprep.subr.bf16.mxu0 0
          %444 = vmatpush1.bf16.msra.mxu0 0
          %445 = vmatprep.subr.bf16.mxu0 0
          %446 = vmatpush1.bf16.msra.mxu0 0
          %447 = vmatprep.mubr.bf16.mxu0 0
          %448 = vmatmul.mubr.bf16.gmra.mrb[0].mxu0 %v413
          %v449 = vpop.f32.mrb[0].mxu0
          %v450 = vadd.f32 0.0, %v449
          %v451 = vpop.f32.mrb[0].mxu0
          %v452 = vpop.f32.mrb[0].mxu0
          %v453 = vadd.f32 0.0, %v452
          %v454 = vpop.f32.mrb[0].mxu0
          %455 = vdwg.mxu0
          %vm456 = vcmp.gt.f32.partialorder %v450, 0.5
          %vm457 = vcmp.gt.f32.partialorder %v453, 0.5
          %v458 = vsel %vm456, 1, 0
          %v459 = vsel %vm457, 1, 0
          %v460 = vcvt.s32.f32 %v458
          %v461 = vcvt.s32.f32 %v459
          %v462 = vpack.c.bf16 %v461, %v460
          %vm463 = vcmp.gt.bf16.partialorder %v462, 1056980736
          %vm464 = vmxor %vm278, 1
          %vm465 = vmxor %vm279, 1
          %vm466 = vmpackc.low %vm465, %vm464
          %vm467 = vmand %vm463, %vm466
          %v468 = vsel %vm467, 65537, 0
          %v469 = vunpack.c.l.b16 %v468
          %v470 = vunpack.c.h.b16 %v468
          %v471 = vpack.c.b16 %v469, %v469
          %v472 = vpack.c.b16 %v470, %v470
          %vm473 = vcmp.ne.s16.totalorder %v471, 0
          %vm474 = vcmp.ne.s16.totalorder %v472, 0
          %v475 = vsel %vm473, 65537, 0
          %v476 = vsel %vm474, 65537, 0
          %v477 = vunpack.c.l.b16 %v475
          %v478 = vunpack.c.l.b16 %v476
          %vm479 = vcmp.ne.s32.totalorder %v477, 0
          %vm480 = vcmp.ne.s32.totalorder %v478, 0
          %v481 = vsel %vm479, 1, 0
          %v482 = vsel %vm480, 1, 0
          %v483 = vcvt.s32.f32 %v481
          %v484 = vcvt.s32.f32 %v482
          %v485 = vpack.c.bf16 %v484, %v483
          %486 = vst.msk [vmem:[#allocation2] sm:$0xff] %vm309, %v485
          %vm487 = vcmp.gt.s32.totalorder %v271, 0
          %vm488 = vcmp.gt.s32.totalorder %v272, 0
          %v489 = vsel %vm487, 1, 0
          %v490 = vsel %vm488, 1, 0
          %491 = vset.pattern.permute.xlu0 0
          %492 = vperm.xlu0 %491, %v489
          %v493 = vpop.permute.xlu0 %492
          %494 = vset.pattern.permute.xlu0 0
          %495 = vperm.xlu0 %494, %v490
          %v496 = vpop.permute.xlu0 %495
          %vm497 = vcmp.eq.s32.totalorder %v493, 1
          %vm498 = vcmp.eq.s32.totalorder %v496, 1
          %vm499 = vmand %vm497, %vm286
          %vm500 = vmand %vm498, %vm287
          %vm501 = vcmp.gt.s32.totalorder %v270, 0
          %v502 = vlaneseq
          %v503 = vshrl.u32 %v502, 7
          %v504 = vsub.s32 0, %v503
          %v505 = vrot.slane %v267, %v504
          %vm506 = vcmp.eq.s32.totalorder %v505, %v274
          %vm507 = vcmp.eq.s32.totalorder %v505, %v275
          %v508 = vsel %vm501, 1, 0
          %v509 = vlaneseq
          %v510 = vshrl.u32 %v509, 7
          %v511 = vsub.s32 0, %v510
          %v512 = vrot.slane %v508, %v511
          %vm513 = vcmp.eq.s32.totalorder %v512, 1
          %vm514 = vmand %vm513, %vm506
          %vm515 = vmand %vm513, %vm507
          %vm516 = vmor %vm499, %vm514
          %vm517 = vmor %vm500, %vm515
          %vm518 = vmor %vm516, %vm278
          %vm519 = vmor %vm517, %vm279
          %v520 = vsel %vm518, 1, 0
          %v521 = vsel %vm519, 1, 0
          %v522 = vcvt.s32.f32 %v520
          %v523 = vcvt.s32.f32 %v521
          %v524 = vpack.c.bf16 %v523, %v522
          %v526 = vsel %vm309, %v524, 0
          %528 = vmatprep.subr.bf16.mxu0 0
          %529 = vmatpush1.bf16.msra.mxu0 %v524
          %530 = vmatprep.subr.bf16.mxu0 0
          %531 = vmatpush1.bf16.msra.mxu0 0
          %532 = vmatprep.subr.bf16.mxu0 0
          %533 = vmatpush1.bf16.msra.mxu0 0
          %534 = vmatprep.subr.bf16.mxu0 0
          %535 = vmatpush1.bf16.msra.mxu0 0
          %536 = vmatprep.subr.bf16.mxu0 0
          %537 = vmatpush1.bf16.msra.mxu0 0
          %538 = vmatprep.subr.bf16.mxu0 0
          %539 = vmatpush1.bf16.msra.mxu0 0
          %540 = vmatprep.subr.bf16.mxu0 0
          %541 = vmatpush1.bf16.msra.mxu0 0
          %542 = vmatprep.subr.bf16.mxu0 0
          %543 = vmatpush1.bf16.msra.mxu0 0
          %544 = vmatprep.subr.bf16.mxu0 0
          %545 = vmatpush1.bf16.msra.mxu0 0
          %546 = vmatprep.subr.bf16.mxu0 0
          %547 = vmatpush1.bf16.msra.mxu0 0
          %548 = vmatprep.subr.bf16.mxu0 0
          %549 = vmatpush1.bf16.msra.mxu0 0
          %550 = vmatprep.subr.bf16.mxu0 0
          %551 = vmatpush1.bf16.msra.mxu0 0
          %552 = vmatprep.subr.bf16.mxu0 0
          %553 = vmatpush1.bf16.msra.mxu0 0
          %554 = vmatprep.subr.bf16.mxu0 0
          %555 = vmatpush1.bf16.msra.mxu0 0
          %556 = vmatprep.subr.bf16.mxu0 0
          %557 = vmatpush1.bf16.msra.mxu0 0
          %558 = vmatprep.subr.bf16.mxu0 0
          %559 = vmatpush1.bf16.msra.mxu0 0
          %560 = vmatprep.mubr.bf16.mxu0 0
          %561 = vmatmul.mubr.bf16.gmra.mrb[0].mxu0 %v526
          %v562 = vpop.f32.mrb[0].mxu0
          %v563 = vadd.f32 0.0, %v562
          %v564 = vpop.f32.mrb[0].mxu0
          %v565 = vpop.f32.mrb[0].mxu0
          %v566 = vadd.f32 0.0, %v565
          %v567 = vpop.f32.mrb[0].mxu0
          %568 = vdwg.mxu0
          %vm569 = vcmp.gt.f32.partialorder %v563, 0.5
          %vm570 = vcmp.gt.f32.partialorder %v566, 0.5
          %v571 = vsel %vm569, 1, 0
          %v572 = vsel %vm570, 1, 0
          %v573 = vcvt.s32.f32 %v571
          %v574 = vcvt.s32.f32 %v572
          %v575 = vpack.c.bf16 %v574, %v573
          %v577 = vsel %vm309, %v575, 0
          %579 = vmatprep.subr.bf16.mxu0 0
          %580 = vmatpush1.bf16.msra.mxu0 %v575
          %581 = vmatprep.subr.bf16.mxu0 0
          %582 = vmatpush1.bf16.msra.mxu0 0
          %583 = vmatprep.subr.bf16.mxu0 0
          %584 = vmatpush1.bf16.msra.mxu0 0
          %585 = vmatprep.subr.bf16.mxu0 0
          %586 = vmatpush1.bf16.msra.mxu0 0
          %587 = vmatprep.subr.bf16.mxu0 0
          %588 = vmatpush1.bf16.msra.mxu0 0
          %589 = vmatprep.subr.bf16.mxu0 0
          %590 = vmatpush1.bf16.msra.mxu0 0
          %591 = vmatprep.subr.bf16.mxu0 0
          %592 = vmatpush1.bf16.msra.mxu0 0
          %593 = vmatprep.subr.bf16.mxu0 0
          %594 = vmatpush1.bf16.msra.mxu0 0
          %595 = vmatprep.subr.bf16.mxu0 0
          %596 = vmatpush1.bf16.msra.mxu0 0
          %597 = vmatprep.subr.bf16.mxu0 0
          %598 = vmatpush1.bf16.msra.mxu0 0
          %599 = vmatprep.subr.bf16.mxu0 0
          %600 = vmatpush1.bf16.msra.mxu0 0
          %601 = vmatprep.subr.bf16.mxu0 0
          %602 = vmatpush1.bf16.msra.mxu0 0
          %603 = vmatprep.subr.bf16.mxu0 0
          %604 = vmatpush1.bf16.msra.mxu0 0
          %605 = vmatprep.subr.bf16.mxu0 0
          %606 = vmatpush1.bf16.msra.mxu0 0
          %607 = vmatprep.subr.bf16.mxu0 0
          %608 = vmatpush1.bf16.msra.mxu0 0
          %609 = vmatprep.subr.bf16.mxu0 0
          %610 = vmatpush1.bf16.msra.mxu0 0
          %611 = vmatprep.mubr.bf16.mxu0 0
          %612 = vmatmul.mubr.bf16.gmra.mrb[0].mxu0 %v577
          %v613 = vpop.f32.mrb[0].mxu0
          %v614 = vadd.f32 0.0, %v613
          %v615 = vpop.f32.mrb[0].mxu0
          %v616 = vpop.f32.mrb[0].mxu0
          %v617 = vadd.f32 0.0, %v616
          %v618 = vpop.f32.mrb[0].mxu0
          %619 = vdwg.mxu0
          %vm620 = vcmp.gt.f32.partialorder %v614, 0.5
          %vm621 = vcmp.gt.f32.partialorder %v617, 0.5
          %v622 = vsel %vm620, 1, 0
          %v623 = vsel %vm621, 1, 0
          %v624 = vcvt.s32.f32 %v622
          %v625 = vcvt.s32.f32 %v623
          %v626 = vpack.c.bf16 %v625, %v624
          %v628 = vsel %vm309, %v626, 0
          %630 = vmatprep.subr.bf16.mxu0 0
          %631 = vmatpush1.bf16.msra.mxu0 %v626
          %632 = vmatprep.subr.bf16.mxu0 0
          %633 = vmatpush1.bf16.msra.mxu0 0
          %634 = vmatprep.subr.bf16.mxu0 0
          %635 = vmatpush1.bf16.msra.mxu0 0
          %636 = vmatprep.subr.bf16.mxu0 0
          %637 = vmatpush1.bf16.msra.mxu0 0
          %638 = vmatprep.subr.bf16.mxu0 0
          %639 = vmatpush1.bf16.msra.mxu0 0
          %640 = vmatprep.subr.bf16.mxu0 0
          %641 = vmatpush1.bf16.msra.mxu0 0
          %642 = vmatprep.subr.bf16.mxu0 0
          %643 = vmatpush1.bf16.msra.mxu0 0
          %644 = vmatprep.subr.bf16.mxu0 0
          %645 = vmatpush1.bf16.msra.mxu0 0
          %646 = vmatprep.subr.bf16.mxu0 0
          %647 = vmatpush1.bf16.msra.mxu0 0
          %648 = vmatprep.subr.bf16.mxu0 0
          %649 = vmatpush1.bf16.msra.mxu0 0
          %650 = vmatprep.subr.bf16.mxu0 0
          %651 = vmatpush1.bf16.msra.mxu0 0
          %652 = vmatprep.subr.bf16.mxu0 0
          %653 = vmatpush1.bf16.msra.mxu0 0
          %654 = vmatprep.subr.bf16.mxu0 0
          %655 = vmatpush1.bf16.msra.mxu0 0
          %656 = vmatprep.subr.bf16.mxu0 0
          %657 = vmatpush1.bf16.msra.mxu0 0
          %658 = vmatprep.subr.bf16.mxu0 0
          %659 = vmatpush1.bf16.msra.mxu0 0
          %660 = vmatprep.subr.bf16.mxu0 0
          %661 = vmatpush1.bf16.msra.mxu0 0
          %662 = vmatprep.mubr.bf16.mxu0 0
          %663 = vmatmul.mubr.bf16.gmra.mrb[0].mxu0 %v628
          %v664 = vpop.f32.mrb[0].mxu0
          %v665 = vadd.f32 0.0, %v664
          %v666 = vpop.f32.mrb[0].mxu0
          %v667 = vpop.f32.mrb[0].mxu0
          %v668 = vadd.f32 0.0, %v667
          %v669 = vpop.f32.mrb[0].mxu0
          %670 = vdwg.mxu0
          %vm671 = vcmp.gt.f32.partialorder %v665, 0.5
          %vm672 = vcmp.gt.f32.partialorder %v668, 0.5
          %v673 = vsel %vm671, 1, 0
          %v674 = vsel %vm672, 1, 0
          %v675 = vcvt.s32.f32 %v673
          %v676 = vcvt.s32.f32 %v674
          %v677 = vpack.c.bf16 %v676, %v675
          %v679 = vsel %vm309, %v677, 0
          %681 = vmatprep.subr.bf16.mxu0 0
          %682 = vmatpush1.bf16.msra.mxu0 %v677
          %683 = vmatprep.subr.bf16.mxu0 0
          %684 = vmatpush1.bf16.msra.mxu0 0
          %685 = vmatprep.subr.bf16.mxu0 0
          %686 = vmatpush1.bf16.msra.mxu0 0
          %687 = vmatprep.subr.bf16.mxu0 0
          %688 = vmatpush1.bf16.msra.mxu0 0
          %689 = vmatprep.subr.bf16.mxu0 0
          %690 = vmatpush1.bf16.msra.mxu0 0
          %691 = vmatprep.subr.bf16.mxu0 0
          %692 = vmatpush1.bf16.msra.mxu0 0
          %693 = vmatprep.subr.bf16.mxu0 0
          %694 = vmatpush1.bf16.msra.mxu0 0
          %695 = vmatprep.subr.bf16.mxu0 0
          %696 = vmatpush1.bf16.msra.mxu0 0
          %697 = vmatprep.subr.bf16.mxu0 0
          %698 = vmatpush1.bf16.msra.mxu0 0
          %699 = vmatprep.subr.bf16.mxu0 0
          %700 = vmatpush1.bf16.msra.mxu0 0
          %701 = vmatprep.subr.bf16.mxu0 0
          %702 = vmatpush1.bf16.msra.mxu0 0
          %703 = vmatprep.subr.bf16.mxu0 0
          %704 = vmatpush1.bf16.msra.mxu0 0
          %705 = vmatprep.subr.bf16.mxu0 0
          %706 = vmatpush1.bf16.msra.mxu0 0
          %707 = vmatprep.subr.bf16.mxu0 0
          %708 = vmatpush1.bf16.msra.mxu0 0
          %709 = vmatprep.subr.bf16.mxu0 0
          %710 = vmatpush1.bf16.msra.mxu0 0
          %711 = vmatprep.subr.bf16.mxu0 0
          %712 = vmatpush1.bf16.msra.mxu0 0
          %713 = vmatprep.mubr.bf16.mxu0 0
          %714 = vmatmul.mubr.bf16.gmra.mrb[0].mxu0 %v679
          %v715 = vpop.f32.mrb[0].mxu0
          %v716 = vadd.f32 0.0, %v715
          %v717 = vpop.f32.mrb[0].mxu0
          %v718 = vpop.f32.mrb[0].mxu0
          %v719 = vadd.f32 0.0, %v718
          %v720 = vpop.f32.mrb[0].mxu0
          %721 = vdwg.mxu0
          %vm722 = vcmp.gt.f32.partialorder %v716, 0.5
          %vm723 = vcmp.gt.f32.partialorder %v719, 0.5
          %v724 = vsel %vm722, 1, 0
          %v725 = vsel %vm723, 1, 0
          %v726 = vcvt.s32.f32 %v724
          %v727 = vcvt.s32.f32 %v725
          %v728 = vpack.c.bf16 %v727, %v726
          %vm729 = vcmp.gt.bf16.partialorder %v728, 1056980736
          %vm730 = vmand %vm729, %vm466
          %v731 = vsel %vm730, 65537, 0
          %v732 = vunpack.c.l.b16 %v731
          %v733 = vunpack.c.h.b16 %v731
          %v734 = vpack.c.b16 %v732, %v732
          %v735 = vpack.c.b16 %v733, %v733
          %vm736 = vcmp.ne.s16.totalorder %v734, 0
          %vm737 = vcmp.ne.s16.totalorder %v735, 0
          %v738 = vsel %vm736, 65537, 0
          %v739 = vsel %vm737, 65537, 0
          %v740 = vunpack.c.l.b16 %v738
          %v741 = vunpack.c.l.b16 %v739
          %vm742 = vcmp.ne.s32.totalorder %v740, 0
          %vm743 = vcmp.ne.s32.totalorder %v741, 0
          %v744 = vsel %vm742, 1, 0
          %v745 = vsel %vm743, 1, 0
          %v746 = vcvt.s32.f32 %v744
          %v747 = vcvt.s32.f32 %v745
          %v748 = vpack.c.bf16 %v747, %v746
          %749 = vst.msk [vmem:[#allocation3] sm:$0xff] %vm309, %v748
        $region40: #{tpu_custom_call.1} parent=35 // pred_fallthru
          _
        %s750 = smul.u32 %s23, 16
        %v751 = vlaneseq
        %v752 = vshrl.u32 %v751, 7
        %v753 = vadd.s32 %v752, 8
        %v754 = vstv %s750
        %v755 = vadd.s32 %v752, %v754
        %v756 = vadd.s32 %v753, %v754
        %v757 = vlaneseq
        %v758 = vand.u32 %v757, 127
        %v759 = vld [vmem:[%s244] sm:$0x1]
        %s760 = scalar_lea.vmem %s249, %s750
        %v761 = vld [vmem:[%s760] sm:$0xff]
        %v762 = vld [vmem:[%s760 + $0x8] sm:$0xff]
        %v763 = vlaneseq
        %v764 = vshrl.u32 %v763, 7
        %v765 = vsub.s32 0, %v764
        %v766 = vrot.slane %v759, %v765
        %vm767 = vcmp.eq.s32.totalorder %v766, %v755
        %vm768 = vcmp.eq.s32.totalorder %v766, %v756
        %vm769 = vcmp.ne.s32.totalorder %v758, %v755
        %vm770 = vcmp.ne.s32.totalorder %v758, %v756
        %vm771 = vmand %vm767, %vm769
        %vm772 = vmand %vm768, %vm770
        %v773 = vsel %vm771, 1, 0
        %v774 = vsel %vm772, 1, 0
        %v775 = vcvt.s32.f32 %v773
        %v776 = vcvt.s32.f32 %v774
        %v777 = vpack.c.bf16 %v776, %v775
        %v779 = vunpack.c.l.b16 %v777
        %v780 = vunpack.c.h.b16 %v777
        %v781 = vpack.c.b16 %v779, %v779
        %v782 = vpack.c.b16 %v780, %v780
        %vm785 = vcmask 125952
        %786 = vst.msk [vmem:[%s241] sm:$0xf] %vm785, %v781
        %787 = vst.msk [vmem:[%s241 + $0x4] sm:$0xf] %vm785, %v782
        %vm788 = vcmp.lt.s32.totalorder %v758, %v755
        %vm789 = vcmp.lt.s32.totalorder %v758, %v756
        %vm790 = vmand %vm771, %vm788
        %vm791 = vmand %vm772, %vm789
        %v792 = vsel %vm790, 1, 0
        %v793 = vsel %vm791, 1, 0
        %v794 = vcvt.s32.f32 %v792
        %v795 = vcvt.s32.f32 %v793
        %v796 = vpack.c.bf16 %v795, %v794
        %v798 = vunpack.c.l.b16 %v796
        %v799 = vunpack.c.h.b16 %v796
        %v800 = vpack.c.b16 %v798, %v798
        %v801 = vpack.c.b16 %v799, %v799
        %s804 = scalar_lea.vmem %s241, 8 [#allocation4]
        %805 = vst.msk [vmem:[%s804] sm:$0xf] %vm785, %v800
        %806 = vst.msk [vmem:[%s804 + $0x4] sm:$0xf] %vm785, %v801
        %vm807 = vcmp.gt.s32.totalorder %v758, %v755
        %vm808 = vcmp.gt.s32.totalorder %v758, %v756
        %vm809 = vmand %vm771, %vm807
        %vm810 = vmand %vm772, %vm808
        %v811 = vsel %vm809, 1, 0
        %v812 = vsel %vm810, 1, 0
        %v813 = vcvt.s32.f32 %v811
        %v814 = vcvt.s32.f32 %v812
        %v815 = vpack.c.bf16 %v814, %v813
        %v817 = vunpack.c.l.b16 %v815
        %v818 = vunpack.c.h.b16 %v815
        %v819 = vpack.c.b16 %v817, %v817
        %v820 = vpack.c.b16 %v818, %v818
        %s823 = scalar_lea.vmem %s241, 16 [#allocation4]
        %824 = vst.msk [vmem:[%s823] sm:$0xf] %vm785, %v819
        %825 = vst.msk [vmem:[%s823 + $0x4] sm:$0xf] %vm785, %v820
        %s826 = sshra.s32 %s750, 4
        %s827 = sand.u32 %s750, 15
        %s828 = smul.addr %s826, 8
        %s829 = scalar_lea.vmem [#allocation3], %s828
        %v830 = vld [vmem:[%s829] sm:$0xff]
        %v832 = vunpack.c.l.b16 %v830
        %v833 = vunpack.c.h.b16 %v830
        %v834 = vpack.c.b16 %v832, %v832
        %v835 = vpack.c.b16 %v833, %v833
        %s838 = scalar_lea.vmem %s241, 24 [#allocation4]
        %839 = vst.msk [vmem:[%s838] sm:$0xf] %vm785, %v834
        %840 = vst.msk [vmem:[%s838 + $0x4] sm:$0xf] %vm785, %v835
        %841 = vset.pattern.permute.xlu0 0
        %842 = vperm.xlu0 %841, %v761
        %v843 = vpop.permute.xlu0 %842
        %844 = vset.pattern.permute.xlu0 0
        %845 = vperm.xlu0 %844, %v762
        %v846 = vpop.permute.xlu0 %845
        %vm847 = vcmp.eq.s32.totalorder %v843, %v758
        %vm848 = vcmp.eq.s32.totalorder %v846, %v758
        %v849 = vsel %vm847, 1, 0
        %v850 = vsel %vm848, 1, 0
        %v851 = vcvt.s32.f32 %v849
        %v852 = vcvt.s32.f32 %v850
        %v853 = vpack.c.bf16 %v852, %v851
        %v855 = vunpack.c.l.b16 %v853
        %v856 = vunpack.c.h.b16 %v853
        %v857 = vpack.c.b16 %v855, %v855
        %v858 = vpack.c.b16 %v856, %v856
        %s861 = scalar_lea.vmem %s241, 32 [#allocation4]
        %862 = vst.msk [vmem:[%s861] sm:$0xf] %vm785, %v857
        %863 = vst.msk [vmem:[%s861 + $0x4] sm:$0xf] %vm785, %v858
        %s864 = smul.addr %s826, 8
        %s865 = scalar_lea.vmem [#allocation2], %s864
        %v866 = vld [vmem:[%s865] sm:$0xff]
        %v868 = vunpack.c.l.b16 %v866
        %v869 = vunpack.c.h.b16 %v866
        %v870 = vpack.c.b16 %v868, %v868
        %v871 = vpack.c.b16 %v869, %v869
        %s874 = scalar_lea.vmem %s241, 40 [#allocation4]
        %875 = vst.msk [vmem:[%s874] sm:$0xf] %vm785, %v870
        %876 = vst.msk [vmem:[%s874 + $0x4] sm:$0xf] %vm785, %v871
        %s877 = sand.u32 %s144, 1
        %s878 = scalar_lea.sflag [#allocation5], %s877
        %s879 = sand.u32 %s144, 1
        %s880 = smul.addr %s879, 48
        %s881 = scalar_lea.vmem [#allocation4], %s880
        // Predicated region
        $region41: #{tpu_custom_call.1} parent=35 // pred_check
          %p882 = pneg %p154
        $region42: #{tpu_custom_call.1} parent=35 // pred_check_branch
          %884 = sbr.rel (%p882) target = $region44
        $region43: #{tpu_custom_call.1} parent=35 // pred_region
          %s885 = smul.u32 2, %s23
          %s887 = ssub.s32 768, 768
          %888 = vsyncadd %s878, %s887
          %s889 = smul.addr %s22, 12
          %s890 = sadd.s32 %s885, %s889
          %s891 = smul.addr %s890, 64
          %s892 = scalar_lea.hbm %s4, %s891
          %s893 = sshll.u32 %s881, 4
          %s894 = int_to_ptr.vmem [resolvable:$true] %s893
          %899 = dma.vmem_to_hbm [thread:$0]  %s894, 768, %s892, %s878, 64, 64, 4
        $region44: #{tpu_custom_call.1} parent=35 // pred_fallthru
          _
      $region36: #{tpu_custom_call.1} parent=5 // pred_fallthru
        _
      %p900 = scmp.le.s32.totalorder 2, %s13
      // Predicated region
      $region45: #{tpu_custom_call.1} parent=5 // pred_check
        %p901 = pneg %p900
      $region46: #{tpu_custom_call.1} parent=5 // pred_check_branch
        %903 = sbr.rel (%p901) target = $region48
      $region47: #{tpu_custom_call.1} parent=5 // pred_region
        %s904 = ssub.s32 %s13, 2
        // Predicated region
        $region49: #{tpu_custom_call.1} parent=47 // pred_check
          %p905 = pneg %p160
        $region50: #{tpu_custom_call.1} parent=47 // pred_check_branch
          %907 = sbr.rel (%p905) target = $region52
        $region51: #{tpu_custom_call.1} parent=47 // pred_region
          %s908 = sand.u32 %s145, 1
          %s909 = scalar_lea.sflag [#allocation5], %s908
          %s910 = sand.u32 %s145, 1
          %s911 = smul.addr %s910, 48
          %s912 = scalar_lea.vmem [#allocation4], %s911
          %913 = dma.done %s909, 768
        $region52: #{tpu_custom_call.1} parent=47 // pred_fallthru
          _
      $region48: #{tpu_custom_call.1} parent=5 // pred_fallthru
        _
    $region6: #{tpu_custom_call.1} parent=1 // loop_footer
      %s17 = sadd.s32 1, %s13
    $region7: #{tpu_custom_call.1} parent=1 // loop_footer_branch
      %12 = sbr.rel target = $region3
    $region8: #{tpu_custom_call.1} parent=1 // loop_exit
      _
    %914 = vsyncpa [#allocation5], 1
    %s915 = scalar_lea.sflag [#allocation5], 1
    %916 = vsyncpa %s915, 1

</llo_original>
